<compile_context>
chip_gen: v7x
topology: tpu7x:2x2x1
jax: 0.10.0
libtpu: 0.0.40
codegen_flags: <defaults>
</compile_context>

<pallas_src>
import functools

import jax
import jax.numpy as jnp
from jax.experimental import pallas as pl
from jax.experimental.pallas import tpu as pltpu


def _round_up(x, m):
    return (x + m - 1) // m * m


# -----------------------------------------------------------------------------
# Phase 1: neighbor feature transform.
#   neigh = x @ W_neigh + b_neigh     (written directly in the MXU dtype)
# -----------------------------------------------------------------------------
def _neigh_kernel(x_ref, w_ref, b_ref, neigh_ref):
    neigh_ref[...] = (jnp.dot(x_ref[...], w_ref[...],
                              preferred_element_type=jnp.float32)
                      + b_ref[...]).astype(neigh_ref.dtype)


# -----------------------------------------------------------------------------
# Phase 2: tiled aggregation + fused self-transform epilogue.
#   acc[i] += A[i, k] @ neigh[k]                       (K = src-node axis)
#   out[i]  = relu(acc[i] + x[i] @ W_self + b_self)    (at the last K step)
# neigh is a single VMEM-resident block; we slice the K window in-kernel.
# -----------------------------------------------------------------------------
def _aggregate_kernel(adj_ref, neigh_ref, x_ref, ws_ref, bs_ref, o_ref,
                      acc_ref, *, tk):
    k = pl.program_id(1)

    @pl.when(k == 0)
    def _():
        acc_ref[...] = jnp.zeros_like(acc_ref)

    start = pl.multiple_of(k * tk, tk)
    neigh_tile = neigh_ref[pl.ds(start, tk), :]
    acc_ref[...] += jnp.dot(adj_ref[...], neigh_tile,
                            preferred_element_type=jnp.float32)

    @pl.when(k == pl.num_programs(1) - 1)
    def _():
        self_msg = jnp.dot(x_ref[...], ws_ref[...],
                           preferred_element_type=jnp.float32) + bs_ref[...]
        o_ref[...] = jnp.maximum(acc_ref[...] + self_msg,
                                 0.0).astype(o_ref.dtype)


def graph_conv(x, edge_index, w_self, b_self, w_neigh, b_neigh,
               *, tm=512, tk=2048, mxu_dtype=jnp.bfloat16):
    """GraphConv forward.

    x: [N, Cin] f32.  edge_index: [2, E] int32 (row = src, col = dst).
    Weights stored pre-transposed as [Cin, Cout].  Returns [N, Cout] f32.
    """
    n, cin = x.shape
    cout = w_self.shape[1]

    # ---- layout: feature dim -> 128 lanes; node dim -> tile-aligned pad ----
    cout_p = _round_up(cout, 128)

    # Clamp tiles to the (128-aligned) problem size, then require one tile to
    # divide the other so padding is max(tm, tk), never an lcm blow-up.
    tm = min(tm, _round_up(n, 128))
    tk = min(tk, _round_up(n, 128))
    assert max(tm, tk) % min(tm, tk) == 0, (
        f"tm={tm} and tk={tk} must divide one another to avoid lcm padding")
    n_pad = _round_up(n, max(tm, tk))

    x_p = jnp.pad(x, ((0, n_pad - n), (0, 0)))
    w_neigh_p = jnp.pad(w_neigh, ((0, 0), (0, cout_p - cout)))
    b_neigh_p = jnp.pad(b_neigh, (0, cout_p - cout)).reshape(1, cout_p)
    w_self_p = jnp.pad(w_self, ((0, 0), (0, cout_p - cout)))
    b_self_p = jnp.pad(b_self, (0, cout_p - cout)).reshape(1, cout_p)

    # Dense adjacency A[dst, src] with edge multiplicities (exact in bf16 for
    # counts <= 256).  Padded rows/cols are zero; padded outputs sliced below.
    row, col = edge_index[0], edge_index[1]
    adj = (jnp.zeros((n_pad, n_pad), jnp.float32)
           .at[col, row].add(1.0)).astype(mxu_dtype)

    elt = jnp.dtype(mxu_dtype).itemsize

    # --------------------------- phase 1: neigh ----------------------------
    tr = max(tm, tk)  # divides n_pad by construction; large tile, few steps
    cost1 = pl.CostEstimate(
        flops=2 * n_pad * cin * cout_p,
        transcendentals=0,
        bytes_accessed=(n_pad * cin * 4 + cin * cout_p * 4 + cout_p * 4
                        + n_pad * cout_p * elt))
    neigh = pl.pallas_call(
        _neigh_kernel,
        out_shape=jax.ShapeDtypeStruct((n_pad, cout_p), mxu_dtype),
        grid_spec=pltpu.PrefetchScalarGridSpec(
            num_scalar_prefetch=0,
            grid=(n_pad // tr,),
            in_specs=[pl.BlockSpec((tr, cin), lambda i: (i, 0)),
                      pl.BlockSpec((cin, cout_p), lambda i: (0, 0)),
                      pl.BlockSpec((1, cout_p), lambda i: (0, 0))],
            out_specs=pl.BlockSpec((tr, cout_p), lambda i: (i, 0)),
        ),
        compiler_params=pltpu.CompilerParams(
            dimension_semantics=("parallel",)),
        cost_estimate=cost1,
    )(x_p, w_neigh_p, b_neigh_p)

    # -------------------------- phase 2: aggregation ------------------------
    k_steps = n_pad // tk
    total_steps = (n_pad // tm) * k_steps
    adj_kwargs = {}
    adj_bufs = 2
    if total_steps >= 3:
        adj_bufs = 3
        adj_kwargs["pipeline_mode"] = pl.Buffered(3)  # deepen the DMA pipeline

    # Explicit VMEM budget (v7x has only 64 MiB physical / 32 MiB scoped).
    vmem_limit = 32 * 1024 * 1024
    vmem_bytes = (adj_bufs * tm * tk * elt              # adjacency stream
                  + 2 * n_pad * cout_p * elt            # resident neigh
                  + 2 * (tm * cin + cin * cout_p + cout_p) * 4
                  + tm * cout_p * 4                     # f32 accumulator
                  + 2 * tm * cout_p * 4)                # output
    assert vmem_bytes <= vmem_limit, (
        f"phase-2 working set {vmem_bytes/2**20:.1f} MiB exceeds "
        f"{vmem_limit/2**20:.0f} MiB; use smaller tm/tk")

    cost2 = pl.CostEstimate(
        flops=2 * n_pad * n_pad * cout_p + 2 * n_pad * cin * cout_p,
        transcendentals=0,
        bytes_accessed=(n_pad * n_pad * elt             # adjacency (dominant)
                        + n_pad * cout_p * elt          # neigh (read once)
                        + n_pad * cin * 4               # x for self transform
                        + cin * cout_p * 4 + cout_p * 4
                        + n_pad * cout_p * 4))          # out

    out = pl.pallas_call(
        functools.partial(_aggregate_kernel, tk=tk),
        out_shape=jax.ShapeDtypeStruct((n_pad, cout_p), jnp.float32),
        grid_spec=pltpu.PrefetchScalarGridSpec(
            num_scalar_prefetch=0,
            grid=(n_pad // tm, k_steps),
            in_specs=[
                pl.BlockSpec((tm, tk), lambda i, k: (i, k), **adj_kwargs),
                # full-extent neigh block: loaded once, VMEM-resident,
                # sliced in-kernel -> no per-dst-tile re-DMA.
                pl.BlockSpec((n_pad, cout_p), lambda i, k: (0, 0)),
                pl.BlockSpec((tm, cin), lambda i, k: (i, 0)),
                pl.BlockSpec((cin, cout_p), lambda i, k: (0, 0)),
                pl.BlockSpec((1, cout_p), lambda i, k: (0, 0)),
            ],
            out_specs=pl.BlockSpec((tm, cout_p), lambda i, k: (i, 0)),
            scratch_shapes=[pltpu.VMEM((tm, cout_p), jnp.float32)],
        ),
        compiler_params=pltpu.CompilerParams(
            dimension_semantics=("parallel", "arbitrary"),
            vmem_limit_bytes=vmem_limit),
        cost_estimate=cost2,
    )(adj, neigh, x_p, w_self_p, b_self_p)

    return out[:n, :cout]


def graph_conv_ref(x, edge_index, w_self, b_self, w_neigh, b_neigh):
    """Pure-JAX reference mirroring the PyTorch forward."""
    row, col = edge_index[0], edge_index[1]
    neigh = x @ w_neigh + b_neigh
    agg = jnp.zeros_like(neigh).at[col].add(neigh[row])
    out = x @ w_self + b_self + agg
    return jnp.maximum(out, 0.0)


if __name__ == "__main__":
    key = jax.random.PRNGKey(0)
    k_x, k_e, k_ws, k_bs, k_wn, k_bn = jax.random.split(key, 6)

    # Small shapes, but big enough to exercise a multi-tile grid in the f32
    # check (tm=128, tk=256 -> 4 x 2 aggregation grid with K accumulation).
    N, C_IN, C_OUT, E = 384, 16, 32, 1024

    x = jax.random.normal(k_x, (N, C_IN), jnp.float32)
    edge_index = jax.random.randint(k_e, (2, E), 0, N, jnp.int32)

    bound = 1.0 / (C_IN ** 0.5)
    w_self = jax.random.uniform(k_ws, (C_IN, C_OUT), jnp.float32, -bound, bound)
    b_self = jax.random.uniform(k_bs, (C_OUT,), jnp.float32, -bound, bound)
    w_neigh = jax.random.uniform(k_wn, (C_IN, C_OUT), jnp.float32, -bound, bound)
    b_neigh = jax.random.uniform(k_bn, (C_OUT,), jnp.float32, -bound, bound)

    ref = graph_conv_ref(x, edge_index, w_self, b_self, w_neigh, b_neigh)

    # f32 MXU path: tight semantic check on a real multi-tile grid.
    out_f32 = graph_conv(x, edge_index, w_self, b_self, w_neigh, b_neigh,
                         tm=128, tk=256, mxu_dtype=jnp.float32)
    jax.block_until_ready(out_f32)
    assert out_f32.shape == (N, C_OUT)
    assert jnp.allclose(out_f32, ref, atol=1e-4, rtol=1e-4), "f32 path mismatch"

    # Default bf16 fast path (large tiles clamp to the padded problem here).
    out_bf16 = graph_conv(x, edge_index, w_self, b_self, w_neigh, b_neigh)
    jax.block_until_ready(out_bf16)
    assert out_bf16.shape == (N, C_OUT)
    assert jnp.allclose(out_bf16, ref, atol=5e-2, rtol=5e-2), "bf16 path mismatch"

    print("KERNEL_OK")
</pallas_src>

<mosaic_0001>
module attributes {stable_mosaic.version = 11 : i64} {
  func.func @_neigh_kernel(%arg0: i32, %arg1: memref<256x16xf32, #tpu.memory_space<vmem>>, %arg2: memref<16x128xf32, #tpu.memory_space<vmem>>, %arg3: memref<1x128xf32, #tpu.memory_space<vmem>>, %arg4: memref<256x128xf32, #tpu.memory_space<vmem>>) attributes {dimension_semantics = [#tpu.dimension_semantics<parallel>], iteration_bounds = array<i64: 2>, scalar_prefetch = 0 : i64, scratch_operands = 0 : i64, tpu.core_type = #tpu.core_type<tc>, window_params = [{transform_indices = @transform_0, window_bounds = array<i64: 256, 16>}, {pipeline_mode = #tpu.pipeline_mode<synchronous>, transform_indices = @transform_1, window_bounds = array<i64: 16, 128>}, {pipeline_mode = #tpu.pipeline_mode<synchronous>, transform_indices = @transform_2, window_bounds = array<i64: 1, 128>}, {transform_indices = @transform_3, window_bounds = array<i64: 256, 128>}]} {
    %c0 = arith.constant 0 : index
    %c0_0 = arith.constant 0 : index
    %0 = vector.load %arg1[%c0, %c0_0] : memref<256x16xf32, #tpu.memory_space<vmem>>, vector<256x16xf32>
    %c0_1 = arith.constant 0 : index
    %c0_2 = arith.constant 0 : index
    %1 = vector.load %arg2[%c0_1, %c0_2] : memref<16x128xf32, #tpu.memory_space<vmem>>, vector<16x128xf32>
    %cst = arith.constant dense<0.000000e+00> : vector<256x128xf32>
    %2 = tpu.matmul %0, %1, %cst {dimension_numbers = #tpu.dot_dimension_numbers<[1], [0], [0], [1], [0, 0, 1, 1], [], []>} : vector<256x16xf32>, vector<16x128xf32>, vector<256x128xf32> -> vector<256x128xf32>
    %c0_3 = arith.constant 0 : index
    %c0_4 = arith.constant 0 : index
    %3 = vector.load %arg3[%c0_3, %c0_4] : memref<1x128xf32, #tpu.memory_space<vmem>>, vector<1x128xf32>
    %4 = vector.broadcast %3 : vector<1x128xf32> to vector<256x128xf32>
    %5 = arith.addf %2, %4 : vector<256x128xf32>
    %c0_5 = arith.constant 0 : index
    %c0_6 = arith.constant 0 : index
    %6 = vector.load %arg4[%c0_5, %c0_6] : memref<256x128xf32, #tpu.memory_space<vmem>>, vector<256x128xf32>
    tpu.vector_store %arg4[%c0_5, %c0_6], %5 {strides = array<i32>} : memref<256x128xf32, #tpu.memory_space<vmem>>, vector<256x128xf32>,
    return
  }
  func.func @transform_0(%arg0: i32) -> (i32, i32) {
    %c0_i32 = arith.constant 0 : i32
    %c0_i32_0 = arith.constant 0 : i32
    return %arg0, %c0_i32 : i32, i32
  }
  func.func @transform_1(%arg0: i32) -> (i32, i32) {
    %c0_i32 = arith.constant 0 : i32
    %c0_i32_0 = arith.constant 0 : i32
    %c0_i32_1 = arith.constant 0 : i32
    return %c0_i32, %c0_i32_0 : i32, i32
  }
  func.func @transform_2(%arg0: i32) -> (i32, i32) {
    %c0_i32 = arith.constant 0 : i32
    %c0_i32_0 = arith.constant 0 : i32
    %c0_i32_1 = arith.constant 0 : i32
    return %c0_i32, %c0_i32_0 : i32, i32
  }
  func.func @transform_3(%arg0: i32) -> (i32, i32) {
    %c0_i32 = arith.constant 0 : i32
    %c0_i32_0 = arith.constant 0 : i32
    return %arg0, %c0_i32 : i32, i32
  }
}

</mosaic_0001>

<llo_original>
// kernel: tpu_custom_call.1
$region0: #{tpu_custom_call.1}
  #allocation0 [shape = 'u32[]', space=smem, size = 0x4, offset = 0x4, fixed_abs, tag = 'smem constant byte address 0x4 - core index']
  #allocation1 [shape = 'u32[144,128]{1,0:T(1,128)}', space=vmem, size = 0x12000, scoped, tag = 'internal scratch']
  %s0 = inlined_call_operand.vmem [shape: f32[512,16], index: 0, kind: input, shape index: {}]
  %s1 = inlined_call_operand.vmem [shape: f32[16,128], index: 1, kind: input, shape index: {}]
  %s2 = inlined_call_operand.vmem [shape: f32[1,128], index: 2, kind: input, shape index: {}]
  %s3 = inlined_call_operand.hbm [shape: f32[512,128], index: 3, kind: output, shape index: {}]
  %s4 = sld [smem:[#allocation0]]
  $region45: #{tpu_custom_call.1} parent=0
    _
  %s6 = ssub.s32 1, %s4
  %s7 = scalar_select 0, %s6, %s4
  $region1: #{tpu_custom_call.1} parent=0
    #allocation2 [shape = 'u8[262144]{0}', space=vmem, size = 0x40000, scoped, tag = 'output window, operand 0']
    #allocation3 [shape = 's32[2]{0}', space=sflag, size = 0x8, scoped, tag = 'scoped memory for tpu_custom_call.1']
    %8 = vsyncpa [#allocation3], 0
    %s9 = scalar_lea.sflag [#allocation3], 1
    %10 = vsyncpa %s9, 0
    loop: start=0, step=1, limit=4
    $region2: #{tpu_custom_call.1} parent=1 // loop_pre_header
      _
    $region3: #{tpu_custom_call.1} parent=1 // loop_header
      %s12 = sphi 0, %s16
      %p13 = scmp.ge.s32.totalorder %s12, 4
      %s22 = sphi 0, %s24
      %s25 = sphi 0, %s22
      %s26 = sphi 0, %s25
      %s42 = sphi 0, %s26
      %s46 = sphi 0, %s46
      %s48 = sphi 0, %s46
      %s49 = sphi 0, %s48
      %s63 = sphi 0, %s49
      %s67 = sphi 0, %s67
      %s69 = sphi 0, %s67
      %s70 = sphi 0, %s69
      %s84 = sphi 0, %s70
      %s90 = sphi 0, %s92
      %s93 = sphi 0, %s90
      %s94 = sphi 0, %s93
      %s110 = sphi 0, %s94
    $region4: #{tpu_custom_call.1} parent=1 // loop_header_branch
      %15 = sbr.rel (%p13) target = $region8
    $region5: #{tpu_custom_call.1} parent=1 // loop_body
      %s17 = ssub.s32 %s12, 1
      %s18 = ssub.s32 %s12, 2
      %s19 = sadd.s32 %s12, 1
      %s20 = ssub.s32 %s12, %s19
      %p21 = scmp.eq.s32.totalorder %s20, 0
      %s23 = sadd.s32 %s22, 1
      %s24 = scalar_select %p21, %s22, %s23
      %p27 = pneg %p21
      %p28 = scmp.eq.s32.totalorder %s12, 1
      %p29 = por %p27, %p28
      %p30 = scmp.ne.s32.totalorder %s22, %s25
      %p31 = scmp.eq.s32.totalorder %s12, 0
      %p32 = por %p30, %p31
      %p33 = scmp.ne.s32.totalorder %s22, %s25
      %p34 = scmp.eq.s32.totalorder %s17, 1
      %p35 = por %p33, %p34
      %p36 = scmp.ne.s32.totalorder %s25, %s26
      %p37 = scmp.eq.s32.totalorder %s17, 0
      %p38 = por %p36, %p37
      %p39 = scmp.ne.s32.totalorder %s25, %s26
      %p40 = scmp.eq.s32.totalorder %s18, 1
      %p41 = por %p39, %p40
      %p43 = scmp.ne.s32.totalorder %s26, %s42
      %p44 = scmp.eq.s32.totalorder %s18, 0
      %p45 = por %p43, %p44
      %s47 = sadd.s32 %s46, 1
      %p50 = scmp.eq.s32.totalorder %s12, 1
      %p51 = scmp.ne.s32.totalorder %s46, %s48
      %p52 = scmp.eq.s32.totalorder %s12, 0
      %p53 = por %p51, %p52
      %p54 = scmp.ne.s32.totalorder %s46, %s48
      %p55 = scmp.eq.s32.totalorder %s17, 1
      %p56 = por %p54, %p55
      %p57 = scmp.ne.s32.totalorder %s48, %s49
      %p58 = scmp.eq.s32.totalorder %s17, 0
      %p59 = por %p57, %p58
      %p60 = scmp.ne.s32.totalorder %s48, %s49
      %p61 = scmp.eq.s32.totalorder %s18, 1
      %p62 = por %p60, %p61
      %p64 = scmp.ne.s32.totalorder %s49, %s63
      %p65 = scmp.eq.s32.totalorder %s18, 0
      %p66 = por %p64, %p65
      %s68 = sadd.s32 %s67, 1
      %p71 = scmp.eq.s32.totalorder %s12, 1
      %p72 = scmp.ne.s32.totalorder %s67, %s69
      %p73 = scmp.eq.s32.totalorder %s12, 0
      %p74 = por %p72, %p73
      %p75 = scmp.ne.s32.totalorder %s67, %s69
      %p76 = scmp.eq.s32.totalorder %s17, 1
      %p77 = por %p75, %p76
      %p78 = scmp.ne.s32.totalorder %s69, %s70
      %p79 = scmp.eq.s32.totalorder %s17, 0
      %p80 = por %p78, %p79
      %p81 = scmp.ne.s32.totalorder %s69, %s70
      %p82 = scmp.eq.s32.totalorder %s18, 1
      %p83 = por %p81, %p82
      %p85 = scmp.ne.s32.totalorder %s70, %s84
      %p86 = scmp.eq.s32.totalorder %s18, 0
      %p87 = por %p85, %p86
      %s88 = ssub.s32 %s12, %s19
      %p89 = scmp.eq.s32.totalorder %s88, 0
      %s91 = sadd.s32 %s90, 1
      %s92 = scalar_select %p89, %s90, %s91
      %p95 = pneg %p89
      %p96 = scmp.eq.s32.totalorder %s12, 1
      %p97 = por %p95, %p96
      %p98 = scmp.ne.s32.totalorder %s90, %s93
      %p99 = scmp.eq.s32.totalorder %s12, 0
      %p100 = por %p98, %p99
      %p101 = scmp.ne.s32.totalorder %s90, %s93
      %p102 = scmp.eq.s32.totalorder %s17, 1
      %p103 = por %p101, %p102
      %p104 = scmp.ne.s32.totalorder %s93, %s94
      %p105 = scmp.eq.s32.totalorder %s17, 0
      %p106 = por %p104, %p105
      %p107 = scmp.ne.s32.totalorder %s93, %s94
      %p108 = scmp.eq.s32.totalorder %s18, 1
      %p109 = por %p107, %p108
      %p111 = scmp.ne.s32.totalorder %s94, %s110
      %p112 = scmp.eq.s32.totalorder %s18, 0
      %p113 = por %p111, %p112
      %p114 = scmp.le.s32.totalorder 1, %s12
      %p115 = scmp.lt.s32.totalorder %s12, 3
      %p116 = pnand %p114, %p115
      %p117 = pneg %p116
      // Predicated region
      $region9: #{tpu_custom_call.1} parent=5 // pred_check
        _
      $region10: #{tpu_custom_call.1} parent=5 // pred_check_branch
        %119 = sbr.rel (%p116) target = $region12
      $region11: #{tpu_custom_call.1} parent=5 // pred_region
        %s120 = ssub.s32 %s12, 1
        // Predicated region
        $region13: #{tpu_custom_call.1} parent=11 // pred_check
          %p121 = pneg %p59
        $region14: #{tpu_custom_call.1} parent=11 // pred_check_branch
          %123 = sbr.rel (%p121) target = $region16
        $region15: #{tpu_custom_call.1} parent=11 // pred_region
          _
        $region16: #{tpu_custom_call.1} parent=11 // pred_fallthru
          _
        // Predicated region
        $region17: #{tpu_custom_call.1} parent=11 // pred_check
          %p124 = pneg %p80
        $region18: #{tpu_custom_call.1} parent=11 // pred_check_branch
          %126 = sbr.rel (%p124) target = $region20
        $region19: #{tpu_custom_call.1} parent=11 // pred_region
          _
        $region20: #{tpu_custom_call.1} parent=11 // pred_fallthru
          _
      $region12: #{tpu_custom_call.1} parent=5 // pred_fallthru
        _
      %p127 = scmp.lt.s32.totalorder %s12, 2
      // Predicated region
      $region21: #{tpu_custom_call.1} parent=5 // pred_check
        %p128 = pneg %p127
      $region22: #{tpu_custom_call.1} parent=5 // pred_check_branch
        %130 = sbr.rel (%p128) target = $region24
      $region23: #{tpu_custom_call.1} parent=5 // pred_region
        // Predicated region
        $region25: #{tpu_custom_call.1} parent=23 // pred_check
          %p131 = pneg %p32
        $region26: #{tpu_custom_call.1} parent=23 // pred_check_branch
          %133 = sbr.rel (%p131) target = $region28
        $region27: #{tpu_custom_call.1} parent=23 // pred_region
          %s134 = smul.u32 32, %s12
          %p135 = scmp.lt.s32.totalorder %s134, 63
          %s136 = scalar_select %p135, %s134, 63
          %s137 = smul.addr %s136, 8
          %s138 = scalar_lea.vmem %s0, %s137
          %s139 = smul.u32 32, %s12
        $region28: #{tpu_custom_call.1} parent=23 // pred_fallthru
          _
      $region24: #{tpu_custom_call.1} parent=5 // pred_fallthru
        _
      %p140 = scmp.le.s32.totalorder 1, %s12
      %p141 = scmp.lt.s32.totalorder %s12, 3
      %p142 = pnand %p140, %p141
      %p143 = pneg %p142
      // Predicated region
      $region29: #{tpu_custom_call.1} parent=5 // pred_check
        _
      $region30: #{tpu_custom_call.1} parent=5 // pred_check_branch
        %145 = sbr.rel (%p142) target = $region32
      $region31: #{tpu_custom_call.1} parent=5 // pred_region
        %s146 = ssub.s32 %s12, 1
        %s147 = smul.u32 32, %s17
        %p148 = scmp.lt.s32.totalorder %s147, 63
        %s149 = scalar_select %p148, %s147, 63
        %s150 = smul.addr %s149, 8
        %s151 = scalar_lea.vmem %s0, %s150
        %p152 = pneg %p38
        %p153 = pneg %p35
        %p154 = pneg %p59
        %p155 = pneg %p56
        %p156 = pneg %p80
        %p157 = pneg %p77
        %p158 = pneg %p106
        %p159 = pneg %p103
        %s160 = sand.u32 %s93, 1
        %s161 = scalar_lea.sflag [#allocation3], %s160
        %s162 = sand.u32 %s93, 1
        %s163 = smul.addr %s162, 256
        %s164 = scalar_lea.vmem [#allocation2], %s163
        %s165 = smul.u32 32, %s17
        %p166 = scmp.lt.s32.totalorder %s165, 63
        %s167 = scalar_select %p166, %s165, 63
        %s168 = smul.addr %s167, 8
        %s169 = scalar_lea.vmem %s0, %s168
        %s170 = smul.u32 32, %s17
        %s171 = smul.u32 32, %s17
        %v172 = vld [vmem:[%s169] sm:$0xff]
        %v173 = vld [vmem:[%s169 + $0x8] sm:$0xff]
        %v174 = vld [vmem:[%s169 + $0x10] sm:$0xff]
        %v175 = vld [vmem:[%s169 + $0x18] sm:$0xff]
        %v176 = vld [vmem:[%s169 + $0x20] sm:$0xff]
        %v177 = vld [vmem:[%s169 + $0x28] sm:$0xff]
        %v178 = vld [vmem:[%s169 + $0x30] sm:$0xff]
        %v179 = vld [vmem:[%s169 + $0x38] sm:$0xff]
        %v180 = vld [vmem:[%s169 + $0x40] sm:$0xff]
        %v181 = vld [vmem:[%s169 + $0x48] sm:$0xff]
        %v182 = vld [vmem:[%s169 + $0x50] sm:$0xff]
        %v183 = vld [vmem:[%s169 + $0x58] sm:$0xff]
        %v184 = vld [vmem:[%s169 + $0x60] sm:$0xff]
        %v185 = vld [vmem:[%s169 + $0x68] sm:$0xff]
        %v186 = vld [vmem:[%s169 + $0x70] sm:$0xff]
        %v187 = vld [vmem:[%s169 + $0x78] sm:$0xff]
        %v188 = vld [vmem:[%s169 + $0x80] sm:$0xff]
        %v189 = vld [vmem:[%s169 + $0x88] sm:$0xff]
        %v190 = vld [vmem:[%s169 + $0x90] sm:$0xff]
        %v191 = vld [vmem:[%s169 + $0x98] sm:$0xff]
        %v192 = vld [vmem:[%s169 + $0xa0] sm:$0xff]
        %v193 = vld [vmem:[%s169 + $0xa8] sm:$0xff]
        %v194 = vld [vmem:[%s169 + $0xb0] sm:$0xff]
        %v195 = vld [vmem:[%s169 + $0xb8] sm:$0xff]
        %v196 = vld [vmem:[%s169 + $0xc0] sm:$0xff]
        %v197 = vld [vmem:[%s169 + $0xc8] sm:$0xff]
        %v198 = vld [vmem:[%s169 + $0xd0] sm:$0xff]
        %v199 = vld [vmem:[%s169 + $0xd8] sm:$0xff]
        %v200 = vld [vmem:[%s169 + $0xe0] sm:$0xff]
        %v201 = vld [vmem:[%s169 + $0xe8] sm:$0xff]
        %v202 = vld [vmem:[%s169 + $0xf0] sm:$0xff]
        %v203 = vld [vmem:[%s169 + $0xf8] sm:$0xff]
        %v204 = vld [vmem:[%s1] sm:$0xff]
        %v205 = vld [vmem:[%s1 + $0x8] sm:$0xff]
        %v206 = vld [vmem:[%s2] sm:$0x1]
        %v208 = vlaneseq
        %v209 = vshrl.u32 %v208, 7
        %v210 = vsub.s32 0, %v209
        %v211 = vrot.slane %v206, %v210
        %vm213 = vcmask 130048
        %v215 = vsel %vm213, %v172, 0
        %v218 = vsel %vm213, %v173, 0
        %v221 = vsel %vm213, %v174, 0
        %v224 = vsel %vm213, %v175, 0
        %v227 = vsel %vm213, %v176, 0
        %v230 = vsel %vm213, %v177, 0
        %v233 = vsel %vm213, %v178, 0
        %v236 = vsel %vm213, %v179, 0
        %v239 = vsel %vm213, %v180, 0
        %v242 = vsel %vm213, %v181, 0
        %v245 = vsel %vm213, %v182, 0
        %v248 = vsel %vm213, %v183, 0
        %v251 = vsel %vm213, %v184, 0
        %v254 = vsel %vm213, %v185, 0
        %v257 = vsel %vm213, %v186, 0
        %v260 = vsel %vm213, %v187, 0
        %v263 = vsel %vm213, %v188, 0
        %v266 = vsel %vm213, %v189, 0
        %v269 = vsel %vm213, %v190, 0
        %v272 = vsel %vm213, %v191, 0
        %v275 = vsel %vm213, %v192, 0
        %v278 = vsel %vm213, %v193, 0
        %v281 = vsel %vm213, %v194, 0
        %v284 = vsel %vm213, %v195, 0
        %v287 = vsel %vm213, %v196, 0
        %v290 = vsel %vm213, %v197, 0
        %v293 = vsel %vm213, %v198, 0
        %v296 = vsel %vm213, %v199, 0
        %v299 = vsel %vm213, %v200, 0
        %v302 = vsel %vm213, %v201, 0
        %v305 = vsel %vm213, %v202, 0
        %v308 = vsel %vm213, %v203, 0
        %310 = vmatprep.subr.mxu0 0.0
        %311 = vmatpush1.msra.mxu0 %v204
        %312 = vmatprep.subr.mxu0 0.0
        %313 = vmatpush1.msra.mxu0 %v205
        %314 = vmatprep.subr.mxu0 0.0
        %315 = vmatpush1.msra.mxu0 0.0
        %316 = vmatprep.subr.mxu0 0.0
        %317 = vmatpush1.msra.mxu0 0.0
        %318 = vmatprep.subr.mxu0 0.0
        %319 = vmatpush1.msra.mxu0 0.0
        %320 = vmatprep.subr.mxu0 0.0
        %321 = vmatpush1.msra.mxu0 0.0
        %322 = vmatprep.subr.mxu0 0.0
        %323 = vmatpush1.msra.mxu0 0.0
        %324 = vmatprep.subr.mxu0 0.0
        %325 = vmatpush1.msra.mxu0 0.0
        %326 = vmatprep.subr.mxu0 0.0
        %327 = vmatpush1.msra.mxu0 0.0
        %328 = vmatprep.subr.mxu0 0.0
        %329 = vmatpush1.msra.mxu0 0.0
        %330 = vmatprep.subr.mxu0 0.0
        %331 = vmatpush1.msra.mxu0 0.0
        %332 = vmatprep.subr.mxu0 0.0
        %333 = vmatpush1.msra.mxu0 0.0
        %334 = vmatprep.subr.mxu0 0.0
        %335 = vmatpush1.msra.mxu0 0.0
        %336 = vmatprep.subr.mxu0 0.0
        %337 = vmatpush1.msra.mxu0 0.0
        %338 = vmatprep.subr.mxu0 0.0
        %339 = vmatpush1.msra.mxu0 0.0
        %340 = vmatprep.subr.mxu0 0.0
        %341 = vmatpush1.msra.mxu0 0.0
        %342 = vmatprep.subr.mxu0 0.0
        %343 = vmatpush1.msra.mxu0 0.0
        %344 = vmatprep.subr.mxu0 0.0
        %345 = vmatpush1.msra.mxu0 0.0
        %346 = vmatprep.subr.mxu0 0.0
        %347 = vmatpush1.msra.mxu0 0.0
        %348 = vmatprep.subr.mxu0 0.0
        %349 = vmatpush1.msra.mxu0 0.0
        %350 = vmatprep.subr.mxu0 0.0
        %351 = vmatpush1.msra.mxu0 0.0
        %352 = vmatprep.subr.mxu0 0.0
        %353 = vmatpush1.msra.mxu0 0.0
        %354 = vmatprep.subr.mxu0 0.0
        %355 = vmatpush1.msra.mxu0 0.0
        %356 = vmatprep.subr.mxu0 0.0
        %357 = vmatpush1.msra.mxu0 0.0
        %358 = vmatprep.subr.mxu0 0.0
        %359 = vmatpush1.msra.mxu0 0.0
        %360 = vmatprep.subr.mxu0 0.0
        %361 = vmatpush1.msra.mxu0 0.0
        %362 = vmatprep.subr.mxu0 0.0
        %363 = vmatpush1.msra.mxu0 0.0
        %364 = vmatprep.subr.mxu0 0.0
        %365 = vmatpush1.msra.mxu0 0.0
        %366 = vmatprep.subr.mxu0 0.0
        %367 = vmatpush1.msra.mxu0 0.0
        %368 = vmatprep.subr.mxu0 0.0
        %369 = vmatpush1.msra.mxu0 0.0
        %370 = vmatprep.subr.mxu0 0.0
        %371 = vmatpush1.msra.mxu0 0.0
        %372 = vmatprep.subr.mxu0 0.0
        %373 = vmatpush1.msra.mxu0 0.0
        %374 = vmatprep.mubr.f32.mxu0 0.0
        %375 = vmatmul.mubr.f32.gmra.mrb[0].mxu0 %v215
        %v376 = vpop.f32.mrb[0].mxu0
        %v377 = vadd.f32 %v211, %v376
        %v378 = vpop.f32.mrb[0].mxu0
        %379 = vmatprep.mubr.f32.mxu0 0.0
        %380 = vmatmul.mubr.f32.gmra.mrb[0].mxu0 %v218
        %v381 = vpop.f32.mrb[0].mxu0
        %v382 = vadd.f32 %v211, %v381
        %v383 = vpop.f32.mrb[0].mxu0
        %384 = vmatprep.mubr.f32.mxu0 0.0
        %385 = vmatmul.mubr.f32.gmra.mrb[0].mxu0 %v221
        %v386 = vpop.f32.mrb[0].mxu0
        %v387 = vadd.f32 %v211, %v386
        %v388 = vpop.f32.mrb[0].mxu0
        %389 = vmatprep.mubr.f32.mxu0 0.0
        %390 = vmatmul.mubr.f32.gmra.mrb[0].mxu0 %v224
        %v391 = vpop.f32.mrb[0].mxu0
        %v392 = vadd.f32 %v211, %v391
        %v393 = vpop.f32.mrb[0].mxu0
        %394 = vmatprep.mubr.f32.mxu0 0.0
        %395 = vmatmul.mubr.f32.gmra.mrb[0].mxu0 %v227
        %v396 = vpop.f32.mrb[0].mxu0
        %v397 = vadd.f32 %v211, %v396
        %v398 = vpop.f32.mrb[0].mxu0
        %399 = vmatprep.mubr.f32.mxu0 0.0
        %400 = vmatmul.mubr.f32.gmra.mrb[0].mxu0 %v230
        %v401 = vpop.f32.mrb[0].mxu0
        %v402 = vadd.f32 %v211, %v401
        %v403 = vpop.f32.mrb[0].mxu0
        %404 = vmatprep.mubr.f32.mxu0 0.0
        %405 = vmatmul.mubr.f32.gmra.mrb[0].mxu0 %v233
        %v406 = vpop.f32.mrb[0].mxu0
        %v407 = vadd.f32 %v211, %v406
        %v408 = vpop.f32.mrb[0].mxu0
        %409 = vmatprep.mubr.f32.mxu0 0.0
        %410 = vmatmul.mubr.f32.gmra.mrb[0].mxu0 %v236
        %v411 = vpop.f32.mrb[0].mxu0
        %v412 = vadd.f32 %v211, %v411
        %v413 = vpop.f32.mrb[0].mxu0
        %414 = vmatprep.mubr.f32.mxu0 0.0
        %415 = vmatmul.mubr.f32.gmra.mrb[0].mxu0 %v239
        %v416 = vpop.f32.mrb[0].mxu0
        %v417 = vadd.f32 %v211, %v416
        %v418 = vpop.f32.mrb[0].mxu0
        %419 = vmatprep.mubr.f32.mxu0 0.0
        %420 = vmatmul.mubr.f32.gmra.mrb[0].mxu0 %v242
        %v421 = vpop.f32.mrb[0].mxu0
        %v422 = vadd.f32 %v211, %v421
        %v423 = vpop.f32.mrb[0].mxu0
        %424 = vmatprep.mubr.f32.mxu0 0.0
        %425 = vmatmul.mubr.f32.gmra.mrb[0].mxu0 %v245
        %v426 = vpop.f32.mrb[0].mxu0
        %v427 = vadd.f32 %v211, %v426
        %v428 = vpop.f32.mrb[0].mxu0
        %429 = vmatprep.mubr.f32.mxu0 0.0
        %430 = vmatmul.mubr.f32.gmra.mrb[0].mxu0 %v248
        %v431 = vpop.f32.mrb[0].mxu0
        %v432 = vadd.f32 %v211, %v431
        %v433 = vpop.f32.mrb[0].mxu0
        %434 = vmatprep.mubr.f32.mxu0 0.0
        %435 = vmatmul.mubr.f32.gmra.mrb[0].mxu0 %v251
        %v436 = vpop.f32.mrb[0].mxu0
        %v437 = vadd.f32 %v211, %v436
        %v438 = vpop.f32.mrb[0].mxu0
        %439 = vmatprep.mubr.f32.mxu0 0.0
        %440 = vmatmul.mubr.f32.gmra.mrb[0].mxu0 %v254
        %v441 = vpop.f32.mrb[0].mxu0
        %v442 = vadd.f32 %v211, %v441
        %v443 = vpop.f32.mrb[0].mxu0
        %444 = vmatprep.mubr.f32.mxu0 0.0
        %445 = vmatmul.mubr.f32.gmra.mrb[0].mxu0 %v257
        %v446 = vpop.f32.mrb[0].mxu0
        %v447 = vadd.f32 %v211, %v446
        %v448 = vpop.f32.mrb[0].mxu0
        %449 = vmatprep.mubr.f32.mxu0 0.0
        %450 = vmatmul.mubr.f32.gmra.mrb[0].mxu0 %v260
        %v451 = vpop.f32.mrb[0].mxu0
        %v452 = vadd.f32 %v211, %v451
        %v453 = vpop.f32.mrb[0].mxu0
        %454 = vmatprep.mubr.f32.mxu0 0.0
        %455 = vmatmul.mubr.f32.gmra.mrb[0].mxu0 %v263
        %v456 = vpop.f32.mrb[0].mxu0
        %v457 = vadd.f32 %v211, %v456
        %v458 = vpop.f32.mrb[0].mxu0
        %459 = vmatprep.mubr.f32.mxu0 0.0
        %460 = vmatmul.mubr.f32.gmra.mrb[0].mxu0 %v266
        %v461 = vpop.f32.mrb[0].mxu0
        %v462 = vadd.f32 %v211, %v461
        %v463 = vpop.f32.mrb[0].mxu0
        %464 = vmatprep.mubr.f32.mxu0 0.0
        %465 = vmatmul.mubr.f32.gmra.mrb[0].mxu0 %v269
        %v466 = vpop.f32.mrb[0].mxu0
        %v467 = vadd.f32 %v211, %v466
        %v468 = vpop.f32.mrb[0].mxu0
        %469 = vmatprep.mubr.f32.mxu0 0.0
        %470 = vmatmul.mubr.f32.gmra.mrb[0].mxu0 %v272
        %v471 = vpop.f32.mrb[0].mxu0
        %v472 = vadd.f32 %v211, %v471
        %v473 = vpop.f32.mrb[0].mxu0
        %474 = vmatprep.mubr.f32.mxu0 0.0
        %475 = vmatmul.mubr.f32.gmra.mrb[0].mxu0 %v275
        %v476 = vpop.f32.mrb[0].mxu0
        %v477 = vadd.f32 %v211, %v476
        %v478 = vpop.f32.mrb[0].mxu0
        %479 = vmatprep.mubr.f32.mxu0 0.0
        %480 = vmatmul.mubr.f32.gmra.mrb[0].mxu0 %v278
        %v481 = vpop.f32.mrb[0].mxu0
        %v482 = vadd.f32 %v211, %v481
        %v483 = vpop.f32.mrb[0].mxu0
        %484 = vmatprep.mubr.f32.mxu0 0.0
        %485 = vmatmul.mubr.f32.gmra.mrb[0].mxu0 %v281
        %v486 = vpop.f32.mrb[0].mxu0
        %v487 = vadd.f32 %v211, %v486
        %v488 = vpop.f32.mrb[0].mxu0
        %489 = vmatprep.mubr.f32.mxu0 0.0
        %490 = vmatmul.mubr.f32.gmra.mrb[0].mxu0 %v284
        %v491 = vpop.f32.mrb[0].mxu0
        %v492 = vadd.f32 %v211, %v491
        %v493 = vpop.f32.mrb[0].mxu0
        %494 = vmatprep.mubr.f32.mxu0 0.0
        %495 = vmatmul.mubr.f32.gmra.mrb[0].mxu0 %v287
        %v496 = vpop.f32.mrb[0].mxu0
        %v497 = vadd.f32 %v211, %v496
        %v498 = vpop.f32.mrb[0].mxu0
        %499 = vmatprep.mubr.f32.mxu0 0.0
        %500 = vmatmul.mubr.f32.gmra.mrb[0].mxu0 %v290
        %v501 = vpop.f32.mrb[0].mxu0
        %v502 = vadd.f32 %v211, %v501
        %v503 = vpop.f32.mrb[0].mxu0
        %504 = vmatprep.mubr.f32.mxu0 0.0
        %505 = vmatmul.mubr.f32.gmra.mrb[0].mxu0 %v293
        %v506 = vpop.f32.mrb[0].mxu0
        %v507 = vadd.f32 %v211, %v506
        %v508 = vpop.f32.mrb[0].mxu0
        %509 = vmatprep.mubr.f32.mxu0 0.0
        %510 = vmatmul.mubr.f32.gmra.mrb[0].mxu0 %v296
        %v511 = vpop.f32.mrb[0].mxu0
        %v512 = vadd.f32 %v211, %v511
        %v513 = vpop.f32.mrb[0].mxu0
        %514 = vmatprep.mubr.f32.mxu0 0.0
        %515 = vmatmul.mubr.f32.gmra.mrb[0].mxu0 %v299
        %v516 = vpop.f32.mrb[0].mxu0
        %v517 = vadd.f32 %v211, %v516
        %v518 = vpop.f32.mrb[0].mxu0
        %519 = vmatprep.mubr.f32.mxu0 0.0
        %520 = vmatmul.mubr.f32.gmra.mrb[0].mxu0 %v302
        %v521 = vpop.f32.mrb[0].mxu0
        %v522 = vadd.f32 %v211, %v521
        %v523 = vpop.f32.mrb[0].mxu0
        %524 = vmatprep.mubr.f32.mxu0 0.0
        %525 = vmatmul.mubr.f32.gmra.mrb[0].mxu0 %v305
        %v526 = vpop.f32.mrb[0].mxu0
        %v527 = vadd.f32 %v211, %v526
        %v528 = vpop.f32.mrb[0].mxu0
        %529 = vmatprep.mubr.f32.mxu0 0.0
        %530 = vmatmul.mubr.f32.gmra.mrb[0].mxu0 %v308
        %v531 = vpop.f32.mrb[0].mxu0
        %v532 = vadd.f32 %v211, %v531
        %v533 = vpop.f32.mrb[0].mxu0
        %534 = vdwg.mxu0
        %535 = vst [vmem:[%s164] sm:$0xff] %v377
        %536 = vst [vmem:[%s164 + $0x8] sm:$0xff] %v382
        %537 = vst [vmem:[%s164 + $0x10] sm:$0xff] %v387
        %538 = vst [vmem:[%s164 + $0x18] sm:$0xff] %v392
        %539 = vst [vmem:[%s164 + $0x20] sm:$0xff] %v397
        %540 = vst [vmem:[%s164 + $0x28] sm:$0xff] %v402
        %541 = vst [vmem:[%s164 + $0x30] sm:$0xff] %v407
        %542 = vst [vmem:[%s164 + $0x38] sm:$0xff] %v412
        %543 = vst [vmem:[%s164 + $0x40] sm:$0xff] %v417
        %544 = vst [vmem:[%s164 + $0x48] sm:$0xff] %v422
        %545 = vst [vmem:[%s164 + $0x50] sm:$0xff] %v427
        %546 = vst [vmem:[%s164 + $0x58] sm:$0xff] %v432
        %547 = vst [vmem:[%s164 + $0x60] sm:$0xff] %v437
        %548 = vst [vmem:[%s164 + $0x68] sm:$0xff] %v442
        %549 = vst [vmem:[%s164 + $0x70] sm:$0xff] %v447
        %550 = vst [vmem:[%s164 + $0x78] sm:$0xff] %v452
        %551 = vst [vmem:[%s164 + $0x80] sm:$0xff] %v457
        %552 = vst [vmem:[%s164 + $0x88] sm:$0xff] %v462
        %553 = vst [vmem:[%s164 + $0x90] sm:$0xff] %v467
        %554 = vst [vmem:[%s164 + $0x98] sm:$0xff] %v472
        %555 = vst [vmem:[%s164 + $0xa0] sm:$0xff] %v477
        %556 = vst [vmem:[%s164 + $0xa8] sm:$0xff] %v482
        %557 = vst [vmem:[%s164 + $0xb0] sm:$0xff] %v487
        %558 = vst [vmem:[%s164 + $0xb8] sm:$0xff] %v492
        %559 = vst [vmem:[%s164 + $0xc0] sm:$0xff] %v497
        %560 = vst [vmem:[%s164 + $0xc8] sm:$0xff] %v502
        %561 = vst [vmem:[%s164 + $0xd0] sm:$0xff] %v507
        %562 = vst [vmem:[%s164 + $0xd8] sm:$0xff] %v512
        %563 = vst [vmem:[%s164 + $0xe0] sm:$0xff] %v517
        %564 = vst [vmem:[%s164 + $0xe8] sm:$0xff] %v522
        %565 = vst [vmem:[%s164 + $0xf0] sm:$0xff] %v527
        %566 = vst [vmem:[%s164 + $0xf8] sm:$0xff] %v532
        %s567 = sand.u32 %s93, 1
        %s568 = scalar_lea.sflag [#allocation3], %s567
        %s569 = sand.u32 %s93, 1
        %s570 = smul.addr %s569, 256
        %s571 = scalar_lea.vmem [#allocation2], %s570
        // Predicated region
        $region33: #{tpu_custom_call.1} parent=31 // pred_check
          %p572 = pneg %p103
        $region34: #{tpu_custom_call.1} parent=31 // pred_check_branch
          %574 = sbr.rel (%p572) target = $region36
        $region35: #{tpu_custom_call.1} parent=31 // pred_region
          %s575 = smul.u32 32, %s17
          %s577 = ssub.s32 4096, 4096
          %578 = vsyncadd %s568, %s577
          %s579 = smul.addr %s575, 128
          %s580 = scalar_lea.hbm %s3, %s579
          %s581 = sshll.u32 %s571, 4
          %s582 = int_to_ptr.vmem [resolvable:$true] %s581
          %587 = dma.vmem_to_hbm [thread:$0]  %s582, 4096, %s580, %s568, 128, 128, 8
        $region36: #{tpu_custom_call.1} parent=31 // pred_fallthru
          _
      $region32: #{tpu_custom_call.1} parent=5 // pred_fallthru
        _
      %p588 = scmp.le.s32.totalorder 2, %s12
      // Predicated region
      $region37: #{tpu_custom_call.1} parent=5 // pred_check
        %p589 = pneg %p588
      $region38: #{tpu_custom_call.1} parent=5 // pred_check_branch
        %591 = sbr.rel (%p589) target = $region40
      $region39: #{tpu_custom_call.1} parent=5 // pred_region
        %s592 = ssub.s32 %s12, 2
        // Predicated region
        $region41: #{tpu_custom_call.1} parent=39 // pred_check
          %p593 = pneg %p109
        $region42: #{tpu_custom_call.1} parent=39 // pred_check_branch
          %595 = sbr.rel (%p593) target = $region44
        $region43: #{tpu_custom_call.1} parent=39 // pred_region
          %s596 = sand.u32 %s94, 1
          %s597 = scalar_lea.sflag [#allocation3], %s596
          %s598 = sand.u32 %s94, 1
          %s599 = smul.addr %s598, 256
          %s600 = scalar_lea.vmem [#allocation2], %s599
          %601 = dma.done %s597, 4096
        $region44: #{tpu_custom_call.1} parent=39 // pred_fallthru
          _
      $region40: #{tpu_custom_call.1} parent=5 // pred_fallthru
        _
    $region6: #{tpu_custom_call.1} parent=1 // loop_footer
      %s16 = sadd.s32 1, %s12
    $region7: #{tpu_custom_call.1} parent=1 // loop_footer_branch
      %11 = sbr.rel target = $region3
    $region8: #{tpu_custom_call.1} parent=1 // loop_exit
      _
    %602 = vsyncpa [#allocation3], 1
    %s603 = scalar_lea.sflag [#allocation3], 1
    %604 = vsyncpa %s603, 1

</llo_original>
